<compile_context>
chip_gen: v6e
topology: v6e:2x2x1
jax: 0.10.0
libtpu: 0.0.40
codegen_flags: <defaults>
</compile_context>

<pallas_src>
import jax
import jax.numpy as jnp
from jax.experimental import pallas as pl
from jax.experimental.pallas import tpu as pltpu


def _round_up(x, m):
    return ((x + m - 1) // m) * m


def _linear_kernel(x_ref, w_ref, b_ref, o_ref):
    # MXU matmul with f32 accumulation, bias add on the VPU in f32.
    acc = jnp.dot(x_ref[...], w_ref[...], preferred_element_type=jnp.float32)
    o_ref[...] = (acc + b_ref[...].astype(jnp.float32)).astype(o_ref.dtype)


def regression_forward(x, w, b, *, block_rows=1024, min_rows_for_pallas=128):
    """Linear forward: y = x @ w.T + b.

    x: (B, n_in)      -- same layout as PyTorch Linear input
    w: (n_out, n_in)  -- PyTorch weight layout
    b: (n_out,)
    returns (B, n_out)

    For very small batches (B < min_rows_for_pallas) the pallas_call fixed
    cost dwarfs the useful work, so we let XLA fuse the tiny dot instead.
    Pass min_rows_for_pallas=0 to force the Pallas path.
    """
    B, n_in = x.shape
    n_out = w.shape[0]

    if B < min_rows_for_pallas:
        # Tiny-problem fast path: plain XLA, fuses into neighbors for free.
        return (jnp.dot(x, w.T) + b).astype(x.dtype)

    # Row-tile size: multiple of 8 (f32 sublane tiling), capped at block_rows.
    # TODO(synk): if x is ever bf16/int8, round tm to 16/32 instead of 8.
    tm = min(block_rows, _round_up(B, 8))
    grid = (pl.cdiv(B, tm),)

    # One-time transpose of the weight (cheap, fused by XLA); bias as (1, n_out).
    w_t = w.T                      # (n_in, n_out)
    b2 = b.reshape(1, n_out)       # (1, n_out)

    cost = pl.CostEstimate(
        flops=2 * B * n_in * n_out,
        transcendentals=0,
        bytes_accessed=(
            x.dtype.itemsize * B * n_in
            + w.dtype.itemsize * n_in * n_out
            + b.dtype.itemsize * n_out
            + x.dtype.itemsize * B * n_out
        ),
    )

    out = pl.pallas_call(
        _linear_kernel,
        out_shape=jax.ShapeDtypeStruct((B, n_out), x.dtype),
        grid_spec=pltpu.PrefetchScalarGridSpec(
            num_scalar_prefetch=0,
            grid=grid,
            in_specs=[
                # x: one (tm, n_in) row tile per grid step; last dim is the
                # full array dim (no lane padding). Pipelined/double-buffered.
                pl.BlockSpec((tm, n_in), lambda i: (i, 0)),
                # W^T and bias: constant block index -> VMEM-resident.
                pl.BlockSpec((n_in, n_out), lambda i: (0, 0)),
                pl.BlockSpec((1, n_out), lambda i: (0, 0)),
            ],
            out_specs=pl.BlockSpec((tm, n_out), lambda i: (i, 0)),
        ),
        compiler_params=pltpu.CompilerParams(
            # Independent batch tiles -> megacore sharding on v7x.
            dimension_semantics=("parallel",),
        ),
        cost_estimate=cost,
    )(x, w_t, b2)

    return out


if __name__ == "__main__":
    # Small shapes consistent with the module: batch=8, n_inputs=32, n_outputs=16.
    B, N_IN, N_OUT = 8, 32, 16

    key = jax.random.PRNGKey(0)
    k_x, k_w, k_b = jax.random.split(key, 3)

    x = jax.random.normal(k_x, (B, N_IN), dtype=jnp.float32)

    # Deterministic params mimicking nn.Linear's uniform(-1/sqrt(n_in), 1/sqrt(n_in)).
    bound = 1.0 / jnp.sqrt(jnp.float32(N_IN))
    w = jax.random.uniform(k_w, (N_OUT, N_IN), minval=-bound, maxval=bound,
                           dtype=jnp.float32)          # PyTorch weight shape (out, in)
    b = jax.random.uniform(k_b, (N_OUT,), minval=-bound, maxval=bound,
                           dtype=jnp.float32)

    y_ref = jnp.dot(x, w.T, precision=jax.lax.Precision.HIGHEST) + b

    # 1) Force the Pallas path at the tiny spec shape to exercise the kernel.
    y = regression_forward(x, w, b, min_rows_for_pallas=0)
    jax.block_until_ready(y)
    assert y.shape == (B, N_OUT)
    assert jnp.allclose(y, y_ref, atol=1e-4, rtol=1e-4)

    # 2) Default dispatch at the tiny shape (XLA fast path; same math).
    y_xla = regression_forward(x, w, b)
    jax.block_until_ready(y_xla)
    assert jnp.allclose(y_xla, y_ref, atol=5e-2, rtol=5e-2)

    # 3) Larger, ragged batch through the default (Pallas) path: multi-tile
    #    grid with a partial last row-tile, checked against the reference.
    B2 = 2500
    x2 = jax.random.normal(jax.random.PRNGKey(1), (B2, N_IN), dtype=jnp.float32)
    y2 = regression_forward(x2, w, b)
    jax.block_until_ready(y2)
    y2_ref = jnp.dot(x2, w.T, precision=jax.lax.Precision.HIGHEST) + b
    assert y2.shape == (B2, N_OUT)
    assert jnp.allclose(y2, y2_ref, atol=1e-4, rtol=1e-4)

    print("KERNEL_OK")
</pallas_src>

<mosaic_0001>
module attributes {stable_mosaic.version = 11 : i64} {
  func.func @_linear_kernel(%arg0: i32, %arg1: memref<8x32xf32, #tpu.memory_space<vmem>>, %arg2: memref<32x16xf32, #tpu.memory_space<vmem>>, %arg3: memref<1x16xf32, #tpu.memory_space<vmem>>, %arg4: memref<8x16xf32, #tpu.memory_space<vmem>>) attributes {dimension_semantics = [#tpu.dimension_semantics<parallel>], iteration_bounds = array<i64: 1>, scalar_prefetch = 0 : i64, scratch_operands = 0 : i64, tpu.core_type = #tpu.core_type<tc>, window_params = [{transform_indices = @transform_0, window_bounds = array<i64: 8, 32>}, {pipeline_mode = #tpu.pipeline_mode<synchronous>, transform_indices = @transform_1, window_bounds = array<i64: 32, 16>}, {pipeline_mode = #tpu.pipeline_mode<synchronous>, transform_indices = @transform_2, window_bounds = array<i64: 1, 16>}, {transform_indices = @transform_3, window_bounds = array<i64: 8, 16>}]} {
    %c0 = arith.constant 0 : index
    %c0_0 = arith.constant 0 : index
    %0 = vector.load %arg1[%c0, %c0_0] : memref<8x32xf32, #tpu.memory_space<vmem>>, vector<8x32xf32>
    %c0_1 = arith.constant 0 : index
    %c0_2 = arith.constant 0 : index
    %1 = vector.load %arg2[%c0_1, %c0_2] : memref<32x16xf32, #tpu.memory_space<vmem>>, vector<32x16xf32>
    %cst = arith.constant dense<0.000000e+00> : vector<8x16xf32>
    %2 = tpu.matmul %0, %1, %cst {dimension_numbers = #tpu.dot_dimension_numbers<[1], [0], [0], [1], [0, 0, 1, 1], [], []>} : vector<8x32xf32>, vector<32x16xf32>, vector<8x16xf32> -> vector<8x16xf32>
    %c0_3 = arith.constant 0 : index
    %c0_4 = arith.constant 0 : index
    %3 = vector.load %arg3[%c0_3, %c0_4] : memref<1x16xf32, #tpu.memory_space<vmem>>, vector<1x16xf32>
    %4 = vector.broadcast %3 : vector<1x16xf32> to vector<8x16xf32>
    %5 = arith.addf %2, %4 : vector<8x16xf32>
    %c0_5 = arith.constant 0 : index
    %c0_6 = arith.constant 0 : index
    %6 = vector.load %arg4[%c0_5, %c0_6] : memref<8x16xf32, #tpu.memory_space<vmem>>, vector<8x16xf32>
    tpu.vector_store %arg4[%c0_5, %c0_6], %5 {strides = array<i32>} : memref<8x16xf32, #tpu.memory_space<vmem>>, vector<8x16xf32>,
    return
  }
  func.func @transform_0(%arg0: i32) -> (i32, i32) {
    %c0_i32 = arith.constant 0 : i32
    %c0_i32_0 = arith.constant 0 : i32
    return %arg0, %c0_i32 : i32, i32
  }
  func.func @transform_1(%arg0: i32) -> (i32, i32) {
    %c0_i32 = arith.constant 0 : i32
    %c0_i32_0 = arith.constant 0 : i32
    %c0_i32_1 = arith.constant 0 : i32
    return %c0_i32, %c0_i32_0 : i32, i32
  }
  func.func @transform_2(%arg0: i32) -> (i32, i32) {
    %c0_i32 = arith.constant 0 : i32
    %c0_i32_0 = arith.constant 0 : i32
    %c0_i32_1 = arith.constant 0 : i32
    return %c0_i32, %c0_i32_0 : i32, i32
  }
  func.func @transform_3(%arg0: i32) -> (i32, i32) {
    %c0_i32 = arith.constant 0 : i32
    %c0_i32_0 = arith.constant 0 : i32
    return %arg0, %c0_i32 : i32, i32
  }
}

</mosaic_0001>

<llo_original>
// kernel: tpu_custom_call.1
$region0: #{tpu_custom_call.1}
  #allocation0 [shape = 'u32[]', space=smem, size = 0x4, offset = 0x4, fixed_abs, tag = 'smem constant byte address 0x4 - core index']
  #allocation1 [shape = 'u32[144,128]{1,0:T(1,128)}', space=vmem, size = 0x12000, scoped, tag = 'internal scratch']
  %s0 = inlined_call_operand.vmem [shape: f32[8,32], index: 0, kind: input, shape index: {}]
  %s1 = inlined_call_operand.vmem [shape: f32[32,16], index: 1, kind: input, shape index: {}]
  %s2 = inlined_call_operand.vmem [shape: f32[1,16], index: 2, kind: input, shape index: {}]
  %s3 = inlined_call_operand.hbm [shape: f32[8,16], index: 3, kind: output, shape index: {}]
  %s4 = sld [smem:[#allocation0]]
  $region22: #{tpu_custom_call.1} parent=0
    _
  %s6 = ssub.s32 1, %s4
  %s7 = scalar_select 0, %s6, %s4
  $region1: #{tpu_custom_call.1} parent=0
    #allocation2 [shape = 'u8[4096]{0}', space=vmem, size = 0x1000, scoped, tag = 'output window, operand 0, single buffered']
    #allocation3 [shape = 's32[1]{0}', space=sflag, size = 0x4, scoped, tag = 'scoped memory for tpu_custom_call.1']
    %8 = vsyncpa [#allocation3], 0
    // Predicated region
    $region2: #{tpu_custom_call.1} parent=1 // pred_check
      _
    $region3: #{tpu_custom_call.1} parent=1 // pred_check_branch
      %10 = sbr.rel (0) target = $region5
    $region4: #{tpu_custom_call.1} parent=1 // pred_region
      _
    $region5: #{tpu_custom_call.1} parent=1 // pred_fallthru
      _
    // Predicated region
    $region6: #{tpu_custom_call.1} parent=1 // pred_check
      _
    $region7: #{tpu_custom_call.1} parent=1 // pred_check_branch
      %12 = sbr.rel (0) target = $region9
    $region8: #{tpu_custom_call.1} parent=1 // pred_region
      _
    $region9: #{tpu_custom_call.1} parent=1 // pred_fallthru
      _
    // Predicated region
    $region10: #{tpu_custom_call.1} parent=1 // pred_check
      _
    $region11: #{tpu_custom_call.1} parent=1 // pred_check_branch
      %14 = sbr.rel (0) target = $region13
    $region12: #{tpu_custom_call.1} parent=1 // pred_region
      _
    $region13: #{tpu_custom_call.1} parent=1 // pred_fallthru
      _
    %v15 = vld [vmem:[%s0] sm:$0xff]
    %v16 = vld [vmem:[%s1] sm:$0xff]
    %v17 = vld [vmem:[%s1 + $0x8] sm:$0xff]
    %v18 = vld [vmem:[%s1 + $0x10] sm:$0xff]
    %v19 = vld [vmem:[%s1 + $0x18] sm:$0xff]
    %v20 = vld [vmem:[%s2] sm:$0x1]
    %v22 = vlaneseq
    %v23 = vshrl.u32 %v22, 7
    %v24 = vsub.s32 0, %v23
    %v25 = vrot.slane %v20, %v24
    %vm27 = vcmask 261120
    %v29 = vsel %vm27, %v15, 0
    %31 = vmatprep.subr.mxu0 0.0
    %32 = vmatpush1.msra.mxu0 0.0
    %33 = vmatprep.subr.mxu0 0.0
    %34 = vmatpush1.msra.mxu0 0.0
    %35 = vmatprep.subr.mxu0 0.0
    %36 = vmatpush1.msra.mxu0 0.0
    %37 = vmatprep.subr.mxu0 0.0
    %38 = vmatpush1.msra.mxu0 0.0
    %39 = vmatprep.subr.mxu0 0.0
    %40 = vmatpush1.msra.mxu0 0.0
    %41 = vmatprep.subr.mxu0 0.0
    %42 = vmatpush1.msra.mxu0 0.0
    %43 = vmatprep.subr.mxu0 0.0
    %44 = vmatpush1.msra.mxu0 0.0
    %45 = vmatprep.subr.mxu0 0.0
    %46 = vmatpush1.msra.mxu0 0.0
    %47 = vmatprep.subr.mxu0 0.0
    %48 = vmatpush1.msra.mxu0 0.0
    %49 = vmatprep.subr.mxu0 0.0
    %50 = vmatpush1.msra.mxu0 0.0
    %51 = vmatprep.subr.mxu0 0.0
    %52 = vmatpush1.msra.mxu0 0.0
    %53 = vmatprep.subr.mxu0 0.0
    %54 = vmatpush1.msra.mxu0 0.0
    %55 = vmatprep.subr.mxu0 0.0
    %56 = vmatpush1.msra.mxu0 %v19
    %57 = vmatprep.subr.mxu0 0.0
    %58 = vmatpush1.msra.mxu0 %v18
    %59 = vmatprep.subr.mxu0 0.0
    %60 = vmatpush1.msra.mxu0 %v17
    %61 = vmatprep.subr.mxu0 0.0
    %62 = vmatpush1.msra.mxu0 %v16
    %63 = vmatprep.subr.mxu0 0.0
    %64 = vmatpush2.msra.mxu0 0.0
    %65 = vmatprep.subr.mxu0 0.0
    %66 = vmatpush2.msra.mxu0 0.0
    %67 = vmatprep.subr.mxu0 0.0
    %68 = vmatpush2.msra.mxu0 0.0
    %69 = vmatprep.subr.mxu0 0.0
    %70 = vmatpush2.msra.mxu0 0.0
    %71 = vmatprep.subr.mxu0 0.0
    %72 = vmatpush2.msra.mxu0 0.0
    %73 = vmatprep.subr.mxu0 0.0
    %74 = vmatpush2.msra.mxu0 0.0
    %75 = vmatprep.subr.mxu0 0.0
    %76 = vmatpush2.msra.mxu0 0.0
    %77 = vmatprep.subr.mxu0 0.0
    %78 = vmatpush2.msra.mxu0 0.0
    %79 = vmatprep.subr.mxu0 0.0
    %80 = vmatpush2.msra.mxu0 0.0
    %81 = vmatprep.subr.mxu0 0.0
    %82 = vmatpush2.msra.mxu0 0.0
    %83 = vmatprep.subr.mxu0 0.0
    %84 = vmatpush2.msra.mxu0 0.0
    %85 = vmatprep.subr.mxu0 0.0
    %86 = vmatpush2.msra.mxu0 0.0
    %87 = vmatprep.subr.mxu0 0.0
    %88 = vmatpush2.msra.mxu0 0.0
    %89 = vmatprep.subr.mxu0 0.0
    %90 = vmatpush2.msra.mxu0 0.0
    %91 = vmatprep.subr.mxu0 0.0
    %92 = vmatpush2.msra.mxu0 0.0
    %93 = vmatprep.subr.mxu0 0.0
    %94 = vmatpush2.msra.mxu0 0.0
    %95 = vmatprep.mubr.f32.mxu0 0.0
    %96 = vmatmul.mubr.f32.gmra.mxu0 %v29
    %v97 = vpop.f32.mrf.mxu0
    %v98 = vadd.f32 %v25, %v97
    %v99 = vpop.f32.mrf.mxu0
    %100 = vdwg.mxu0
    %vm101 = vcmask 130048
    %102 = vst.msk [vmem:[#allocation2] sm:$0xff] %vm101, %v98
    // Predicated region
    $region14: #{tpu_custom_call.1} parent=1 // pred_check
      _
    $region15: #{tpu_custom_call.1} parent=1 // pred_check_branch
      %104 = sbr.rel (0) target = $region17
    $region16: #{tpu_custom_call.1} parent=1 // pred_region
      %s106 = ssub.s32 128, 128
      %107 = vsyncadd [#allocation3], %s106
      %s109 = sshll.u32 [#allocation2], 4
      %s110 = int_to_ptr.vmem [resolvable:$true] %s109
      %112 = dma.vmem_to_hbm [thread:$0]  %s110, 128, %s3, [#allocation3]
    $region17: #{tpu_custom_call.1} parent=1 // pred_fallthru
      _
    // Predicated region
    $region18: #{tpu_custom_call.1} parent=1 // pred_check
      _
    $region19: #{tpu_custom_call.1} parent=1 // pred_check_branch
      %114 = sbr.rel (0) target = $region21
    $region20: #{tpu_custom_call.1} parent=1 // pred_region
      %115 = dma.done [#allocation3], 128
    $region21: #{tpu_custom_call.1} parent=1 // pred_fallthru
      _
    %116 = vsyncpa [#allocation3], 1

</llo_original>
